<compile_context>
chip_gen: v6e
topology: v6e:2x2x1
jax: 0.10.0
libtpu: 0.0.40
codegen_flags: <defaults>
</compile_context>

<pallas_src>
import functools

import jax
import jax.numpy as jnp
from jax.experimental import pallas as pl
from jax.experimental.pallas import tpu as pltpu

BN_EPS = 1e-5


def _round_up(x, m):
  return ((x + m - 1) // m) * m


def gcn_fused_kernel(adj_ref, x_ref, wt_ref, b_ref, gamma_ref, beta_ref,
                     out_ref, *, num_layers):
  """Fused GCN forward: all layers in one kernel, activation kept in VMEM.

  Shapes (F = padded feature width, multiple of 128):
    adj_ref   (N, N)
    x_ref     (N, F)          zero-padded input features
    wt_ref    (L, F, F)       per-layer W^T, zero-padded
    b_ref     (L, 1, F)       per-layer bias, zero-padded
    gamma_ref (L, 1, F)       per-layer BN weight, zero-padded
    beta_ref  (L, 1, F)       per-layer BN bias, zero-padded
    out_ref   (N, F)          lane-dense output slab
  """
  adj = adj_ref[...]          # loaded once, reused by every layer
  h = x_ref[...]
  for i in range(num_layers):
    # Reassociated: adj @ (h @ W^T)  -- the N^2 matmul contracts over F_out.
    xw = jnp.dot(h, wt_ref[i], preferred_element_type=jnp.float32)
    z = jnp.dot(adj, xw, preferred_element_type=jnp.float32) + b_ref[i]
    # BatchNorm1d, training mode: batch statistics over the node axis (0),
    # biased variance, one-pass formulation.
    mean = jnp.mean(z, axis=0, keepdims=True)
    mean_sq = jnp.mean(z * z, axis=0, keepdims=True)
    var = mean_sq - mean * mean
    z = (z - mean) * jax.lax.rsqrt(var + BN_EPS)
    z = z * gamma_ref[i] + beta_ref[i]
    if i < num_layers - 1:
      # hidden layers: ReLU; dropout is identity (see TODO at top).
      z = jnp.maximum(z, 0.0)
    h = z
  out_ref[...] = h


def init_gcn_params(key, nfeat, layer_dims, nclass):
  """Deterministic parameter init matching GCN.__init__ shapes (raw layout)."""
  params = []
  in_dim = nfeat
  dims = list(layer_dims[:-1]) + [nclass]  # hidden layers + out_layer
  for out_dim in dims:
    key, kw, kb = jax.random.split(key, 3)
    bound = 1.0 / jnp.sqrt(in_dim)
    w = jax.random.uniform(kw, (out_dim, in_dim), jnp.float32, -bound, bound)
    b = jax.random.uniform(kb, (out_dim,), jnp.float32, -bound, bound)
    gamma = jnp.ones((out_dim,), jnp.float32)   # BatchNorm1d weight
    beta = jnp.zeros((out_dim,), jnp.float32)   # BatchNorm1d bias
    params.append((w, b, gamma, beta))
    in_dim = out_dim
  return params


def pack_params(params, nfeat):
  """One-time pack: transpose, zero-pad to a lane-dense width, stack layers."""
  dims = [nfeat] + [w.shape[0] for (w, _, _, _) in params]
  f_pad = _round_up(max(dims), 128)
  num_layers = len(params)
  wt_all = jnp.zeros((num_layers, f_pad, f_pad), jnp.float32)
  b_all = jnp.zeros((num_layers, 1, f_pad), jnp.float32)
  g_all = jnp.zeros((num_layers, 1, f_pad), jnp.float32)
  be_all = jnp.zeros((num_layers, 1, f_pad), jnp.float32)
  for i, (w, b, gamma, beta) in enumerate(params):
    f_out, f_in = w.shape
    wt_all = wt_all.at[i, :f_in, :f_out].set(jnp.asarray(w, jnp.float32).T)
    b_all = b_all.at[i, 0, :f_out].set(jnp.asarray(b, jnp.float32))
    g_all = g_all.at[i, 0, :f_out].set(jnp.asarray(gamma, jnp.float32))
    be_all = be_all.at[i, 0, :f_out].set(jnp.asarray(beta, jnp.float32))
  return {"wt": wt_all, "b": b_all, "gamma": g_all, "beta": be_all,
          "f_pad": f_pad, "num_layers": num_layers}


def gcn_forward(x, adj, packed, nclass):
  """GCN.forward, fully fused into a single pallas_call."""
  n, nfeat = x.shape
  f_pad = packed["f_pad"]
  num_layers = packed["num_layers"]

  x_pad = jnp.zeros((n, f_pad), jnp.float32).at[:, :nfeat].set(
      jnp.asarray(x, jnp.float32))

  vmem = pl.BlockSpec(memory_space=pltpu.MemorySpace.VMEM)
  kernel = functools.partial(gcn_fused_kernel, num_layers=num_layers)
  out_pad = pl.pallas_call(
      kernel,
      out_shape=jax.ShapeDtypeStruct((n, f_pad), jnp.float32),
      in_specs=[vmem] * 6,
      out_specs=vmem,
  )(jnp.asarray(adj, jnp.float32), x_pad,
    packed["wt"], packed["b"], packed["gamma"], packed["beta"])
  # Slice the real class columns out of the lane-dense slab.
  return out_pad[:, :nclass]


def _reference_forward(x, adj, params):
  """Pure-jnp reference (original associativity, two-pass variance)."""
  h = x
  for i, (w, b, gamma, beta) in enumerate(params):
    z = (adj @ h) @ w.T + b[None, :]
    mean = jnp.mean(z, axis=0, keepdims=True)
    var = jnp.mean((z - mean) ** 2, axis=0, keepdims=True)
    z = (z - mean) / jnp.sqrt(var + BN_EPS) * gamma[None, :] + beta[None, :]
    if i < len(params) - 1:
      z = jnp.maximum(z, 0.0)
    h = z
  return h


if __name__ == "__main__":
  # Small shapes consistent with the module: N nodes, nfeat features,
  # one hidden GCN layer (layer_dims[:-1]), then out_layer -> nclass.
  N, NFEAT, NCLASS = 64, 32, 7
  LAYER_DIMS = [16, 16]

  key = jax.random.PRNGKey(0)
  key, kx, ka = jax.random.split(key, 3)

  x = jax.random.normal(kx, (N, NFEAT), jnp.float32)

  # Deterministic "sparse" adjacency made dense: random edges + self loops,
  # row-normalized.
  a = (jax.random.uniform(ka, (N, N)) < 0.1).astype(jnp.float32)
  a = a + jnp.eye(N, dtype=jnp.float32)
  adj = a / jnp.sum(a, axis=1, keepdims=True)

  params = init_gcn_params(key, NFEAT, LAYER_DIMS, NCLASS)
  packed = pack_params(params, NFEAT)        # transpose/pad/stack once

  out = gcn_forward(x, adj, packed, NCLASS)
  out = jax.block_until_ready(out)

  ref = _reference_forward(x, adj, params)
  assert out.shape == (N, NCLASS)
  assert jnp.allclose(out, ref, atol=1e-4, rtol=1e-4)
  print("KERNEL_OK")
</pallas_src>

<mosaic_0001>
module attributes {stable_mosaic.version = 11 : i64} {
  func.func @gcn_fused_kernel(%arg0: memref<64x64xf32, #tpu.memory_space<vmem>>, %arg1: memref<64x128xf32, #tpu.memory_space<vmem>>, %arg2: memref<2x128x128xf32, #tpu.memory_space<vmem>>, %arg3: memref<2x1x128xf32, #tpu.memory_space<vmem>>, %arg4: memref<2x1x128xf32, #tpu.memory_space<vmem>>, %arg5: memref<2x1x128xf32, #tpu.memory_space<vmem>>, %arg6: memref<64x128xf32, #tpu.memory_space<vmem>>) attributes {dimension_semantics = [], scalar_prefetch = 0 : i64, scratch_operands = 0 : i64, tpu.core_type = #tpu.core_type<tc>} {
    %c0 = arith.constant 0 : index
    %c0_0 = arith.constant 0 : index
    %0 = vector.load %arg0[%c0, %c0_0] : memref<64x64xf32, #tpu.memory_space<vmem>>, vector<64x64xf32>
    %c0_1 = arith.constant 0 : index
    %c0_2 = arith.constant 0 : index
    %1 = vector.load %arg1[%c0_1, %c0_2] : memref<64x128xf32, #tpu.memory_space<vmem>>, vector<64x128xf32>
    %c0_3 = arith.constant 0 : index
    %c0_4 = arith.constant 0 : index
    %c0_5 = arith.constant 0 : index
    %2 = vector.load %arg2[%c0_3, %c0_4, %c0_5] : memref<2x128x128xf32, #tpu.memory_space<vmem>>, vector<1x128x128xf32>
    %3 = vector.shape_cast %2 : vector<1x128x128xf32> to vector<128x128xf32>
    %cst = arith.constant dense<0.000000e+00> : vector<64x128xf32>
    %4 = tpu.matmul %1, %3, %cst {dimension_numbers = #tpu.dot_dimension_numbers<[1], [0], [0], [1], [0, 0, 1, 1], [], []>} : vector<64x128xf32>, vector<128x128xf32>, vector<64x128xf32> -> vector<64x128xf32>
    %cst_6 = arith.constant dense<0.000000e+00> : vector<64x128xf32>
    %5 = tpu.matmul %0, %4, %cst_6 {dimension_numbers = #tpu.dot_dimension_numbers<[1], [0], [0], [1], [0, 0, 1, 1], [], []>} : vector<64x64xf32>, vector<64x128xf32>, vector<64x128xf32> -> vector<64x128xf32>
    %c0_7 = arith.constant 0 : index
    %c0_8 = arith.constant 0 : index
    %c0_9 = arith.constant 0 : index
    %6 = vector.load %arg3[%c0_7, %c0_8, %c0_9] : memref<2x1x128xf32, #tpu.memory_space<vmem>>, vector<1x1x128xf32>
    %7 = vector.shape_cast %6 : vector<1x1x128xf32> to vector<1x128xf32>
    %8 = vector.broadcast %7 : vector<1x128xf32> to vector<64x128xf32>
    %9 = arith.addf %5, %8 : vector<64x128xf32>
    %cst_10 = arith.constant dense<0.000000e+00> : vector<128xf32>
    %10 = vector.multi_reduction <add>, %9, %cst_10 [0] : vector<64x128xf32> to vector<128xf32>
    %11 = vector.shape_cast %10 : vector<128xf32> to vector<1x128xf32>
    %cst_11 = arith.constant 6.400000e+01 : f32
    %12 = vector.broadcast %cst_11 : f32 to vector<1x128xf32>
    %13 = arith.divf %11, %12 : vector<1x128xf32>
    %14 = arith.mulf %9, %9 : vector<64x128xf32>
    %cst_12 = arith.constant dense<0.000000e+00> : vector<128xf32>
    %15 = vector.multi_reduction <add>, %14, %cst_12 [0] : vector<64x128xf32> to vector<128xf32>
    %16 = vector.shape_cast %15 : vector<128xf32> to vector<1x128xf32>
    %cst_13 = arith.constant 6.400000e+01 : f32
    %17 = vector.broadcast %cst_13 : f32 to vector<1x128xf32>
    %18 = arith.divf %16, %17 : vector<1x128xf32>
    %19 = arith.mulf %13, %13 : vector<1x128xf32>
    %20 = arith.subf %18, %19 : vector<1x128xf32>
    %21 = vector.broadcast %13 : vector<1x128xf32> to vector<64x128xf32>
    %22 = arith.subf %9, %21 : vector<64x128xf32>
    %cst_14 = arith.constant 9.99999974E-6 : f32
    %23 = vector.broadcast %cst_14 : f32 to vector<1x128xf32>
    %24 = arith.addf %20, %23 : vector<1x128xf32>
    %25 = math.rsqrt %24 : vector<1x128xf32>
    %26 = vector.broadcast %25 : vector<1x128xf32> to vector<64x128xf32>
    %27 = arith.mulf %22, %26 : vector<64x128xf32>
    %c0_15 = arith.constant 0 : index
    %c0_16 = arith.constant 0 : index
    %c0_17 = arith.constant 0 : index
    %28 = vector.load %arg4[%c0_15, %c0_16, %c0_17] : memref<2x1x128xf32, #tpu.memory_space<vmem>>, vector<1x1x128xf32>
    %29 = vector.shape_cast %28 : vector<1x1x128xf32> to vector<1x128xf32>
    %30 = vector.broadcast %29 : vector<1x128xf32> to vector<64x128xf32>
    %31 = arith.mulf %27, %30 : vector<64x128xf32>
    %c0_18 = arith.constant 0 : index
    %c0_19 = arith.constant 0 : index
    %c0_20 = arith.constant 0 : index
    %32 = vector.load %arg5[%c0_18, %c0_19, %c0_20] : memref<2x1x128xf32, #tpu.memory_space<vmem>>, vector<1x1x128xf32>
    %33 = vector.shape_cast %32 : vector<1x1x128xf32> to vector<1x128xf32>
    %34 = vector.broadcast %33 : vector<1x128xf32> to vector<64x128xf32>
    %35 = arith.addf %31, %34 : vector<64x128xf32>
    %cst_21 = arith.constant 0.000000e+00 : f32
    %36 = vector.broadcast %cst_21 : f32 to vector<64x128xf32>
    %37 = arith.maximumf %35, %36 : vector<64x128xf32>
    %c1 = arith.constant 1 : index
    %c0_22 = arith.constant 0 : index
    %c0_23 = arith.constant 0 : index
    %38 = vector.load %arg2[%c1, %c0_22, %c0_23] : memref<2x128x128xf32, #tpu.memory_space<vmem>>, vector<1x128x128xf32>
    %39 = vector.shape_cast %38 : vector<1x128x128xf32> to vector<128x128xf32>
    %cst_24 = arith.constant dense<0.000000e+00> : vector<64x128xf32>
    %40 = tpu.matmul %37, %39, %cst_24 {dimension_numbers = #tpu.dot_dimension_numbers<[1], [0], [0], [1], [0, 0, 1, 1], [], []>} : vector<64x128xf32>, vector<128x128xf32>, vector<64x128xf32> -> vector<64x128xf32>
    %cst_25 = arith.constant dense<0.000000e+00> : vector<64x128xf32>
    %41 = tpu.matmul %0, %40, %cst_25 {dimension_numbers = #tpu.dot_dimension_numbers<[1], [0], [0], [1], [0, 0, 1, 1], [], []>} : vector<64x64xf32>, vector<64x128xf32>, vector<64x128xf32> -> vector<64x128xf32>
    %c1_26 = arith.constant 1 : index
    %c0_27 = arith.constant 0 : index
    %c0_28 = arith.constant 0 : index
    %42 = vector.load %arg3[%c1_26, %c0_27, %c0_28] : memref<2x1x128xf32, #tpu.memory_space<vmem>>, vector<1x1x128xf32>
    %43 = vector.shape_cast %42 : vector<1x1x128xf32> to vector<1x128xf32>
    %44 = vector.broadcast %43 : vector<1x128xf32> to vector<64x128xf32>
    %45 = arith.addf %41, %44 : vector<64x128xf32>
    %cst_29 = arith.constant dense<0.000000e+00> : vector<128xf32>
    %46 = vector.multi_reduction <add>, %45, %cst_29 [0] : vector<64x128xf32> to vector<128xf32>
    %47 = vector.shape_cast %46 : vector<128xf32> to vector<1x128xf32>
    %cst_30 = arith.constant 6.400000e+01 : f32
    %48 = vector.broadcast %cst_30 : f32 to vector<1x128xf32>
    %49 = arith.divf %47, %48 : vector<1x128xf32>
    %50 = arith.mulf %45, %45 : vector<64x128xf32>
    %cst_31 = arith.constant dense<0.000000e+00> : vector<128xf32>
    %51 = vector.multi_reduction <add>, %50, %cst_31 [0] : vector<64x128xf32> to vector<128xf32>
    %52 = vector.shape_cast %51 : vector<128xf32> to vector<1x128xf32>
    %cst_32 = arith.constant 6.400000e+01 : f32
    %53 = vector.broadcast %cst_32 : f32 to vector<1x128xf32>
    %54 = arith.divf %52, %53 : vector<1x128xf32>
    %55 = arith.mulf %49, %49 : vector<1x128xf32>
    %56 = arith.subf %54, %55 : vector<1x128xf32>
    %57 = vector.broadcast %49 : vector<1x128xf32> to vector<64x128xf32>
    %58 = arith.subf %45, %57 : vector<64x128xf32>
    %cst_33 = arith.constant 9.99999974E-6 : f32
    %59 = vector.broadcast %cst_33 : f32 to vector<1x128xf32>
    %60 = arith.addf %56, %59 : vector<1x128xf32>
    %61 = math.rsqrt %60 : vector<1x128xf32>
    %62 = vector.broadcast %61 : vector<1x128xf32> to vector<64x128xf32>
    %63 = arith.mulf %58, %62 : vector<64x128xf32>
    %c1_34 = arith.constant 1 : index
    %c0_35 = arith.constant 0 : index
    %c0_36 = arith.constant 0 : index
    %64 = vector.load %arg4[%c1_34, %c0_35, %c0_36] : memref<2x1x128xf32, #tpu.memory_space<vmem>>, vector<1x1x128xf32>
    %65 = vector.shape_cast %64 : vector<1x1x128xf32> to vector<1x128xf32>
    %66 = vector.broadcast %65 : vector<1x128xf32> to vector<64x128xf32>
    %67 = arith.mulf %63, %66 : vector<64x128xf32>
    %c1_37 = arith.constant 1 : index
    %c0_38 = arith.constant 0 : index
    %c0_39 = arith.constant 0 : index
    %68 = vector.load %arg5[%c1_37, %c0_38, %c0_39] : memref<2x1x128xf32, #tpu.memory_space<vmem>>, vector<1x1x128xf32>
    %69 = vector.shape_cast %68 : vector<1x1x128xf32> to vector<1x128xf32>
    %70 = vector.broadcast %69 : vector<1x128xf32> to vector<64x128xf32>
    %71 = arith.addf %67, %70 : vector<64x128xf32>
    %c0_40 = arith.constant 0 : index
    %c0_41 = arith.constant 0 : index
    %72 = vector.load %arg6[%c0_40, %c0_41] : memref<64x128xf32, #tpu.memory_space<vmem>>, vector<64x128xf32>
    tpu.vector_store %arg6[%c0_40, %c0_41], %71 {strides = array<i32>} : memref<64x128xf32, #tpu.memory_space<vmem>>, vector<64x128xf32>,
    return
  }
}

</mosaic_0001>

<llo_original>
// kernel: tpu_custom_call.1
$region0: #{tpu_custom_call.1}
  #allocation0 [shape = 'u32[]', space=smem, size = 0x4, offset = 0x4, fixed_abs, tag = 'smem constant byte address 0x4 - core index']
  #allocation1 [shape = 'u32[144,128]{1,0:T(1,128)}', space=vmem, size = 0x12000, scoped, tag = 'internal scratch']
  %s0 = inlined_call_operand.hbm [shape: f32[64,64], index: 0, kind: input, shape index: {}]
  %s1 = inlined_call_operand.hbm [shape: f32[64,128], index: 1, kind: input, shape index: {}]
  %s2 = inlined_call_operand.hbm [shape: f32[2,128,128], index: 2, kind: input, shape index: {}]
  %s3 = inlined_call_operand.vmem [shape: f32[2,1,128], index: 3, kind: input, shape index: {}]
  %s4 = inlined_call_operand.vmem [shape: f32[2,1,128], index: 4, kind: input, shape index: {}]
  %s5 = inlined_call_operand.vmem [shape: f32[2,1,128], index: 5, kind: input, shape index: {}]
  %s6 = inlined_call_operand.hbm [shape: f32[64,128], index: 6, kind: output, shape index: {}]
  %s7 = sld [smem:[#allocation0]]
  $region46: #{tpu_custom_call.1} parent=0
    _
  %s9 = ssub.s32 1, %s7
  %s10 = scalar_select 0, %s9, %s7
  $region1: #{tpu_custom_call.1} parent=0
    #allocation2 [shape = 'u8[32768]{0}', space=vmem, size = 0x8000, scoped, tag = 'input window, operand 0, single buffered']
    #allocation3 [shape = 's32[1]{0}', space=sflag, size = 0x4, scoped, tag = 'scoped memory for tpu_custom_call.1']
    #allocation4 [shape = 's32[1]{0}', space=sflag, size = 0x4, scoped, tag = 'scoped memory for tpu_custom_call.1']
    #allocation5 [shape = 'u8[32768]{0}', space=vmem, size = 0x8000, scoped, tag = 'input window, operand 1, single buffered']
    #allocation6 [shape = 's32[1]{0}', space=sflag, size = 0x4, scoped, tag = 'scoped memory for tpu_custom_call.1']
    #allocation7 [shape = 'u8[131072]{0}', space=vmem, size = 0x20000, scoped, tag = 'input window, operand 2, single buffered']
    #allocation8 [shape = 'u8[32768]{0}', space=vmem, size = 0x8000, scoped, tag = 'output window, operand 0, single buffered']
    %11 = vsyncpa [#allocation3], 0
    %12 = vsyncpa [#allocation6], 0
    %13 = vsyncpa [#allocation4], 0
    // Predicated region
    $region2: #{tpu_custom_call.1} parent=1 // pred_check
      _
    $region3: #{tpu_custom_call.1} parent=1 // pred_check_branch
      %15 = sbr.rel (0) target = $region5
    $region4: #{tpu_custom_call.1} parent=1 // pred_region
      %s17 = ssub.s32 1024, 1024
      %18 = vsyncadd [#allocation3], %s17
      %s19 = sshll.u32 [#allocation2], 4
      %s20 = int_to_ptr.vmem [resolvable:$true] %s19
      %25 = dma.hbm_to_vmem [thread:$0]  %s0, 1024, %s20, [#allocation3], 128, 128, 8
    $region5: #{tpu_custom_call.1} parent=1 // pred_fallthru
      _
    // Predicated region
    $region6: #{tpu_custom_call.1} parent=1 // pred_check
      _
    $region7: #{tpu_custom_call.1} parent=1 // pred_check_branch
      %27 = sbr.rel (0) target = $region9
    $region8: #{tpu_custom_call.1} parent=1 // pred_region
      %s29 = ssub.s32 1024, 1024
      %30 = vsyncadd [#allocation6], %s29
      %s31 = sshll.u32 [#allocation5], 4
      %s32 = int_to_ptr.vmem [resolvable:$true] %s31
      %37 = dma.hbm_to_vmem [thread:$0]  %s1, 1024, %s32, [#allocation6], 128, 128, 8
    $region9: #{tpu_custom_call.1} parent=1 // pred_fallthru
      _
    // Predicated region
    $region10: #{tpu_custom_call.1} parent=1 // pred_check
      _
    $region11: #{tpu_custom_call.1} parent=1 // pred_check_branch
      %39 = sbr.rel (0) target = $region13
    $region12: #{tpu_custom_call.1} parent=1 // pred_region
      %s41 = ssub.s32 4096, 4096
      %42 = vsyncadd [#allocation6], %s41
      %s43 = sshll.u32 [#allocation7], 4
      %s44 = int_to_ptr.vmem [resolvable:$true] %s43
      %49 = dma.hbm_to_vmem [thread:$0]  %s2, 4096, %s44, [#allocation6], 128, 128, 8
    $region13: #{tpu_custom_call.1} parent=1 // pred_fallthru
      _
    // Predicated region
    $region14: #{tpu_custom_call.1} parent=1 // pred_check
      _
    $region15: #{tpu_custom_call.1} parent=1 // pred_check_branch
      %51 = sbr.rel (0) target = $region17
    $region16: #{tpu_custom_call.1} parent=1 // pred_region
      _
    $region17: #{tpu_custom_call.1} parent=1 // pred_fallthru
      _
    // Predicated region
    $region18: #{tpu_custom_call.1} parent=1 // pred_check
      _
    $region19: #{tpu_custom_call.1} parent=1 // pred_check_branch
      %53 = sbr.rel (0) target = $region21
    $region20: #{tpu_custom_call.1} parent=1 // pred_region
      _
    $region21: #{tpu_custom_call.1} parent=1 // pred_fallthru
      _
    // Predicated region
    $region22: #{tpu_custom_call.1} parent=1 // pred_check
      _
    $region23: #{tpu_custom_call.1} parent=1 // pred_check_branch
      %55 = sbr.rel (0) target = $region25
    $region24: #{tpu_custom_call.1} parent=1 // pred_region
      _
    $region25: #{tpu_custom_call.1} parent=1 // pred_fallthru
      _
    // Predicated region
    $region26: #{tpu_custom_call.1} parent=1 // pred_check
      _
    $region27: #{tpu_custom_call.1} parent=1 // pred_check_branch
      %57 = sbr.rel (0) target = $region29
    $region28: #{tpu_custom_call.1} parent=1 // pred_region
      %58 = dma.done [#allocation3], 1024
    $region29: #{tpu_custom_call.1} parent=1 // pred_fallthru
      _
    // Predicated region
    $region30: #{tpu_custom_call.1} parent=1 // pred_check
      _
    $region31: #{tpu_custom_call.1} parent=1 // pred_check_branch
      %60 = sbr.rel (0) target = $region33
    $region32: #{tpu_custom_call.1} parent=1 // pred_region
      %61 = dma.done [#allocation6], 1024
    $region33: #{tpu_custom_call.1} parent=1 // pred_fallthru
      _
    // Predicated region
    $region34: #{tpu_custom_call.1} parent=1 // pred_check
      _
    $region35: #{tpu_custom_call.1} parent=1 // pred_check_branch
      %63 = sbr.rel (0) target = $region37
    $region36: #{tpu_custom_call.1} parent=1 // pred_region
      %64 = dma.done [#allocation6], 4096
    $region37: #{tpu_custom_call.1} parent=1 // pred_fallthru
      _
    %v65 = vld [vmem:[#allocation2] sm:$0xff]
    %v66 = vld [vmem:[#allocation2 + $0x8] sm:$0xff]
    %v67 = vld [vmem:[#allocation2 + $0x10] sm:$0xff]
    %v68 = vld [vmem:[#allocation2 + $0x18] sm:$0xff]
    %v69 = vld [vmem:[#allocation2 + $0x20] sm:$0xff]
    %v70 = vld [vmem:[#allocation2 + $0x28] sm:$0xff]
    %v71 = vld [vmem:[#allocation2 + $0x30] sm:$0xff]
    %v72 = vld [vmem:[#allocation2 + $0x38] sm:$0xff]
    %v73 = vld [vmem:[#allocation5] sm:$0xff]
    %v74 = vld [vmem:[#allocation5 + $0x8] sm:$0xff]
    %v75 = vld [vmem:[#allocation5 + $0x10] sm:$0xff]
    %v76 = vld [vmem:[#allocation5 + $0x18] sm:$0xff]
    %v77 = vld [vmem:[#allocation5 + $0x20] sm:$0xff]
    %v78 = vld [vmem:[#allocation5 + $0x28] sm:$0xff]
    %v79 = vld [vmem:[#allocation5 + $0x30] sm:$0xff]
    %v80 = vld [vmem:[#allocation5 + $0x38] sm:$0xff]
    %v81 = vld [vmem:[#allocation7] sm:$0xff]
    %v82 = vld [vmem:[#allocation7 + $0x8] sm:$0xff]
    %v83 = vld [vmem:[#allocation7 + $0x10] sm:$0xff]
    %v84 = vld [vmem:[#allocation7 + $0x18] sm:$0xff]
    %v85 = vld [vmem:[#allocation7 + $0x20] sm:$0xff]
    %v86 = vld [vmem:[#allocation7 + $0x28] sm:$0xff]
    %v87 = vld [vmem:[#allocation7 + $0x30] sm:$0xff]
    %v88 = vld [vmem:[#allocation7 + $0x38] sm:$0xff]
    %v89 = vld [vmem:[#allocation7 + $0x40] sm:$0xff]
    %v90 = vld [vmem:[#allocation7 + $0x48] sm:$0xff]
    %v91 = vld [vmem:[#allocation7 + $0x50] sm:$0xff]
    %v92 = vld [vmem:[#allocation7 + $0x58] sm:$0xff]
    %v93 = vld [vmem:[#allocation7 + $0x60] sm:$0xff]
    %v94 = vld [vmem:[#allocation7 + $0x68] sm:$0xff]
    %v95 = vld [vmem:[#allocation7 + $0x70] sm:$0xff]
    %v96 = vld [vmem:[#allocation7 + $0x78] sm:$0xff]
    %97 = vmatprep.subr.mxu0 0.0
    %98 = vmatpush1.msra.mxu0 %v96
    %99 = vmatprep.subr.mxu0 0.0
    %100 = vmatpush1.msra.mxu0 %v95
    %101 = vmatprep.subr.mxu0 0.0
    %102 = vmatpush1.msra.mxu0 %v94
    %103 = vmatprep.subr.mxu0 0.0
    %104 = vmatpush1.msra.mxu0 %v93
    %105 = vmatprep.subr.mxu0 0.0
    %106 = vmatpush1.msra.mxu0 %v92
    %107 = vmatprep.subr.mxu0 0.0
    %108 = vmatpush1.msra.mxu0 %v91
    %109 = vmatprep.subr.mxu0 0.0
    %110 = vmatpush1.msra.mxu0 %v90
    %111 = vmatprep.subr.mxu0 0.0
    %112 = vmatpush1.msra.mxu0 %v89
    %113 = vmatprep.subr.mxu0 0.0
    %114 = vmatpush1.msra.mxu0 %v88
    %115 = vmatprep.subr.mxu0 0.0
    %116 = vmatpush1.msra.mxu0 %v87
    %117 = vmatprep.subr.mxu0 0.0
    %118 = vmatpush1.msra.mxu0 %v86
    %119 = vmatprep.subr.mxu0 0.0
    %120 = vmatpush1.msra.mxu0 %v85
    %121 = vmatprep.subr.mxu0 0.0
    %122 = vmatpush1.msra.mxu0 %v84
    %123 = vmatprep.subr.mxu0 0.0
    %124 = vmatpush1.msra.mxu0 %v83
    %125 = vmatprep.subr.mxu0 0.0
    %126 = vmatpush1.msra.mxu0 %v82
    %127 = vmatprep.subr.mxu0 0.0
    %128 = vmatpush1.msra.mxu0 %v81
    %129 = vmatprep.subr.mxu0 0.0
    %130 = vmatpush2.msra.mxu0 0.0
    %131 = vmatprep.subr.mxu0 0.0
    %132 = vmatpush2.msra.mxu0 0.0
    %133 = vmatprep.subr.mxu0 0.0
    %134 = vmatpush2.msra.mxu0 0.0
    %135 = vmatprep.subr.mxu0 0.0
    %136 = vmatpush2.msra.mxu0 0.0
    %137 = vmatprep.subr.mxu0 0.0
    %138 = vmatpush2.msra.mxu0 0.0
    %139 = vmatprep.subr.mxu0 0.0
    %140 = vmatpush2.msra.mxu0 0.0
    %141 = vmatprep.subr.mxu0 0.0
    %142 = vmatpush2.msra.mxu0 0.0
    %143 = vmatprep.subr.mxu0 0.0
    %144 = vmatpush2.msra.mxu0 0.0
    %145 = vmatprep.subr.mxu0 0.0
    %146 = vmatpush2.msra.mxu0 0.0
    %147 = vmatprep.subr.mxu0 0.0
    %148 = vmatpush2.msra.mxu0 0.0
    %149 = vmatprep.subr.mxu0 0.0
    %150 = vmatpush2.msra.mxu0 0.0
    %151 = vmatprep.subr.mxu0 0.0
    %152 = vmatpush2.msra.mxu0 0.0
    %153 = vmatprep.subr.mxu0 0.0
    %154 = vmatpush2.msra.mxu0 0.0
    %155 = vmatprep.subr.mxu0 0.0
    %156 = vmatpush2.msra.mxu0 0.0
    %157 = vmatprep.subr.mxu0 0.0
    %158 = vmatpush2.msra.mxu0 0.0
    %159 = vmatprep.subr.mxu0 0.0
    %160 = vmatpush2.msra.mxu0 0.0
    %161 = vmatprep.mubr.f32.mxu0 0.0
    %162 = vmatmul.mubr.f32.gmra.mxu0 %v73
    %v163 = vpop.f32.mrf.mxu0
    %v164 = vadd.f32 0.0, %v163
    %v165 = vpop.f32.mrf.mxu0
    %166 = vmatprep.mubr.f32.mxu0 0.0
    %167 = vmatmul.mubr.f32.gmra.mxu0 %v74
    %v168 = vpop.f32.mrf.mxu0
    %v169 = vadd.f32 0.0, %v168
    %v170 = vpop.f32.mrf.mxu0
    %171 = vmatprep.mubr.f32.mxu0 0.0
    %172 = vmatmul.mubr.f32.gmra.mxu0 %v75
    %v173 = vpop.f32.mrf.mxu0
    %v174 = vadd.f32 0.0, %v173
    %v175 = vpop.f32.mrf.mxu0
    %176 = vmatprep.mubr.f32.mxu0 0.0
    %177 = vmatmul.mubr.f32.gmra.mxu0 %v76
    %v178 = vpop.f32.mrf.mxu0
    %v179 = vadd.f32 0.0, %v178
    %v180 = vpop.f32.mrf.mxu0
    %181 = vmatprep.mubr.f32.mxu0 0.0
    %182 = vmatmul.mubr.f32.gmra.mxu0 %v77
    %v183 = vpop.f32.mrf.mxu0
    %v184 = vadd.f32 0.0, %v183
    %v185 = vpop.f32.mrf.mxu0
    %186 = vmatprep.mubr.f32.mxu0 0.0
    %187 = vmatmul.mubr.f32.gmra.mxu0 %v78
    %v188 = vpop.f32.mrf.mxu0
    %v189 = vadd.f32 0.0, %v188
    %v190 = vpop.f32.mrf.mxu0
    %191 = vmatprep.mubr.f32.mxu0 0.0
    %192 = vmatmul.mubr.f32.gmra.mxu0 %v79
    %v193 = vpop.f32.mrf.mxu0
    %v194 = vadd.f32 0.0, %v193
    %v195 = vpop.f32.mrf.mxu0
    %196 = vmatprep.mubr.f32.mxu0 0.0
    %197 = vmatmul.mubr.f32.gmra.mxu0 %v80
    %v198 = vpop.f32.mrf.mxu0
    %v199 = vadd.f32 0.0, %v198
    %v200 = vpop.f32.mrf.mxu0
    %201 = vdwg.mxu0
    %v202 = vld [vmem:[%s3] sm:$0x1]
    %v204 = vlaneseq
    %v205 = vshrl.u32 %v204, 7
    %v206 = vsub.s32 0, %v205
    %v207 = vrot.slane %v202, %v206
    %vm209 = vcmask 523264
    %v211 = vsel %vm209, %v65, 0
    %v214 = vsel %vm209, %v66, 0
    %v217 = vsel %vm209, %v67, 0
    %v220 = vsel %vm209, %v68, 0
    %v223 = vsel %vm209, %v69, 0
    %v226 = vsel %vm209, %v70, 0
    %v229 = vsel %vm209, %v71, 0
    %v232 = vsel %vm209, %v72, 0
    %234 = vmatprep.subr.mxu0 0.0
    %235 = vmatpush1.msra.mxu0 0.0
    %236 = vmatprep.subr.mxu0 0.0
    %237 = vmatpush1.msra.mxu0 0.0
    %238 = vmatprep.subr.mxu0 0.0
    %239 = vmatpush1.msra.mxu0 0.0
    %240 = vmatprep.subr.mxu0 0.0
    %241 = vmatpush1.msra.mxu0 0.0
    %242 = vmatprep.subr.mxu0 0.0
    %243 = vmatpush1.msra.mxu0 0.0
    %244 = vmatprep.subr.mxu0 0.0
    %245 = vmatpush1.msra.mxu0 0.0
    %246 = vmatprep.subr.mxu0 0.0
    %247 = vmatpush1.msra.mxu0 0.0
    %248 = vmatprep.subr.mxu0 0.0
    %249 = vmatpush1.msra.mxu0 0.0
    %250 = vmatprep.subr.mxu0 0.0
    %251 = vmatpush1.msra.mxu0 %v199
    %252 = vmatprep.subr.mxu0 0.0
    %253 = vmatpush1.msra.mxu0 %v194
    %254 = vmatprep.subr.mxu0 0.0
    %255 = vmatpush1.msra.mxu0 %v189
    %256 = vmatprep.subr.mxu0 0.0
    %257 = vmatpush1.msra.mxu0 %v184
    %258 = vmatprep.subr.mxu0 0.0
    %259 = vmatpush1.msra.mxu0 %v179
    %260 = vmatprep.subr.mxu0 0.0
    %261 = vmatpush1.msra.mxu0 %v174
    %262 = vmatprep.subr.mxu0 0.0
    %263 = vmatpush1.msra.mxu0 %v169
    %264 = vmatprep.subr.mxu0 0.0
    %265 = vmatpush1.msra.mxu0 %v164
    %266 = vmatprep.subr.mxu0 0.0
    %267 = vmatpush2.msra.mxu0 0.0
    %268 = vmatprep.subr.mxu0 0.0
    %269 = vmatpush2.msra.mxu0 0.0
    %270 = vmatprep.subr.mxu0 0.0
    %271 = vmatpush2.msra.mxu0 0.0
    %272 = vmatprep.subr.mxu0 0.0
    %273 = vmatpush2.msra.mxu0 0.0
    %274 = vmatprep.subr.mxu0 0.0
    %275 = vmatpush2.msra.mxu0 0.0
    %276 = vmatprep.subr.mxu0 0.0
    %277 = vmatpush2.msra.mxu0 0.0
    %278 = vmatprep.subr.mxu0 0.0
    %279 = vmatpush2.msra.mxu0 0.0
    %280 = vmatprep.subr.mxu0 0.0
    %281 = vmatpush2.msra.mxu0 0.0
    %282 = vmatprep.subr.mxu0 0.0
    %283 = vmatpush2.msra.mxu0 0.0
    %284 = vmatprep.subr.mxu0 0.0
    %285 = vmatpush2.msra.mxu0 0.0
    %286 = vmatprep.subr.mxu0 0.0
    %287 = vmatpush2.msra.mxu0 0.0
    %288 = vmatprep.subr.mxu0 0.0
    %289 = vmatpush2.msra.mxu0 0.0
    %290 = vmatprep.subr.mxu0 0.0
    %291 = vmatpush2.msra.mxu0 0.0
    %292 = vmatprep.subr.mxu0 0.0
    %293 = vmatpush2.msra.mxu0 0.0
    %294 = vmatprep.subr.mxu0 0.0
    %295 = vmatpush2.msra.mxu0 0.0
    %296 = vmatprep.subr.mxu0 0.0
    %297 = vmatpush2.msra.mxu0 0.0
    %298 = vmatprep.mubr.f32.mxu0 0.0
    %299 = vmatmul.mubr.f32.gmra.mxu0 %v211
    %v300 = vpop.f32.mrf.mxu0
    %v301 = vadd.f32 %v207, %v300
    %v302 = vpop.f32.mrf.mxu0
    %303 = vmatprep.mubr.f32.mxu0 0.0
    %304 = vmatmul.mubr.f32.gmra.mxu0 %v214
    %v305 = vpop.f32.mrf.mxu0
    %v306 = vadd.f32 %v207, %v305
    %v307 = vpop.f32.mrf.mxu0
    %308 = vmatprep.mubr.f32.mxu0 0.0
    %309 = vmatmul.mubr.f32.gmra.mxu0 %v217
    %v310 = vpop.f32.mrf.mxu0
    %v311 = vadd.f32 %v207, %v310
    %v312 = vpop.f32.mrf.mxu0
    %313 = vmatprep.mubr.f32.mxu0 0.0
    %314 = vmatmul.mubr.f32.gmra.mxu0 %v220
    %v315 = vpop.f32.mrf.mxu0
    %v316 = vadd.f32 %v207, %v315
    %v317 = vpop.f32.mrf.mxu0
    %318 = vmatprep.mubr.f32.mxu0 0.0
    %319 = vmatmul.mubr.f32.gmra.mxu0 %v223
    %v320 = vpop.f32.mrf.mxu0
    %v321 = vadd.f32 %v207, %v320
    %v322 = vpop.f32.mrf.mxu0
    %323 = vmatprep.mubr.f32.mxu0 0.0
    %324 = vmatmul.mubr.f32.gmra.mxu0 %v226
    %v325 = vpop.f32.mrf.mxu0
    %v326 = vadd.f32 %v207, %v325
    %v327 = vpop.f32.mrf.mxu0
    %328 = vmatprep.mubr.f32.mxu0 0.0
    %329 = vmatmul.mubr.f32.gmra.mxu0 %v229
    %v330 = vpop.f32.mrf.mxu0
    %v331 = vadd.f32 %v207, %v330
    %v332 = vpop.f32.mrf.mxu0
    %333 = vmatprep.mubr.f32.mxu0 0.0
    %334 = vmatmul.mubr.f32.gmra.mxu0 %v232
    %v335 = vpop.f32.mrf.mxu0
    %v336 = vadd.f32 %v207, %v335
    %v337 = vpop.f32.mrf.mxu0
    %338 = vdwg.mxu0
    %v339 = vadd.f32 %v301, %v306
    %v340 = vadd.f32 %v339, %v311
    %v341 = vadd.f32 %v340, %v316
    %v342 = vadd.f32 %v341, %v321
    %v343 = vadd.f32 %v342, %v326
    %v344 = vadd.f32 %v343, %v331
    %v345 = vadd.f32 %v344, %v336
    %v346 = vrot.slane %v345, 4
    %v347 = vadd.f32 %v345, %v346
    %v348 = vrot.slane %v347, 2
    %v349 = vadd.f32 %v347, %v348
    %v350 = vrot.slane %v349, 1
    %v351 = vadd.f32 %v349, %v350
    %v352 = vrcp.pop 64.0
    %v353 = vmul.f32 %v351, %v352
    %v354 = vmul.f32 %v301, %v301
    %v355 = vmul.f32 %v306, %v306
    %v356 = vmul.f32 %v311, %v311
    %v357 = vmul.f32 %v316, %v316
    %v358 = vmul.f32 %v321, %v321
    %v359 = vmul.f32 %v326, %v326
    %v360 = vmul.f32 %v331, %v331
    %v361 = vmul.f32 %v336, %v336
    %v362 = vadd.f32 %v354, %v355
    %v363 = vadd.f32 %v362, %v356
    %v364 = vadd.f32 %v363, %v357
    %v365 = vadd.f32 %v364, %v358
    %v366 = vadd.f32 %v365, %v359
    %v367 = vadd.f32 %v366, %v360
    %v368 = vadd.f32 %v367, %v361
    %v369 = vrot.slane %v368, 4
    %v370 = vadd.f32 %v368, %v369
    %v371 = vrot.slane %v370, 2
    %v372 = vadd.f32 %v370, %v371
    %v373 = vrot.slane %v372, 1
    %v374 = vadd.f32 %v372, %v373
    %v375 = vmul.f32 %v374, %v352
    %v376 = vmul.f32 %v353, %v353
    %v377 = vsub.f32 %v375, %v376
    %v378 = vsub.f32 %v301, %v353
    %v379 = vsub.f32 %v306, %v353
    %v380 = vsub.f32 %v311, %v353
    %v381 = vsub.f32 %v316, %v353
    %v382 = vsub.f32 %v321, %v353
    %v383 = vsub.f32 %v326, %v353
    %v384 = vsub.f32 %v331, %v353
    %v385 = vsub.f32 %v336, %v353
    %v386 = vadd.f32 %v377, 1e-05
    %v387 = vrsqrt.pop %v386
    %v388 = vmul.f32 %v378, %v387
    %v389 = vmul.f32 %v379, %v387
    %v390 = vmul.f32 %v380, %v387
    %v391 = vmul.f32 %v381, %v387
    %v392 = vmul.f32 %v382, %v387
    %v393 = vmul.f32 %v383, %v387
    %v394 = vmul.f32 %v384, %v387
    %v395 = vmul.f32 %v385, %v387
    %v396 = vld [vmem:[%s4] sm:$0x1]
    %v398 = vlaneseq
    %v399 = vshrl.u32 %v398, 7
    %v400 = vsub.s32 0, %v399
    %v401 = vrot.slane %v396, %v400
    %v403 = vmul.f32 %v388, %v401
    %v404 = vmul.f32 %v389, %v401
    %v405 = vmul.f32 %v390, %v401
    %v406 = vmul.f32 %v391, %v401
    %v407 = vmul.f32 %v392, %v401
    %v408 = vmul.f32 %v393, %v401
    %v409 = vmul.f32 %v394, %v401
    %v410 = vmul.f32 %v395, %v401
    %v411 = vld [vmem:[%s5] sm:$0x1]
    %v413 = vlaneseq
    %v414 = vshrl.u32 %v413, 7
    %v415 = vsub.s32 0, %v414
    %v416 = vrot.slane %v411, %v415
    %v418 = vadd.f32 %v403, %v416
    %v419 = vadd.f32 %v404, %v416
    %v420 = vadd.f32 %v405, %v416
    %v421 = vadd.f32 %v406, %v416
    %v422 = vadd.f32 %v407, %v416
    %v423 = vadd.f32 %v408, %v416
    %v424 = vadd.f32 %v409, %v416
    %v425 = vadd.f32 %v410, %v416
    %v426 = vmax.f32 %v418, 0.0
    %v427 = vmax.f32 %v419, 0.0
    %v428 = vmax.f32 %v420, 0.0
    %v429 = vmax.f32 %v421, 0.0
    %v430 = vmax.f32 %v422, 0.0
    %v431 = vmax.f32 %v423, 0.0
    %v432 = vmax.f32 %v424, 0.0
    %v433 = vmax.f32 %v425, 0.0
    %s434 = scalar_lea.vmem [#allocation7], 128
    %v435 = vld [vmem:[%s434] sm:$0xff]
    %v436 = vld [vmem:[%s434 + $0x8] sm:$0xff]
    %v437 = vld [vmem:[%s434 + $0x10] sm:$0xff]
    %v438 = vld [vmem:[%s434 + $0x18] sm:$0xff]
    %v439 = vld [vmem:[%s434 + $0x20] sm:$0xff]
    %v440 = vld [vmem:[%s434 + $0x28] sm:$0xff]
    %v441 = vld [vmem:[%s434 + $0x30] sm:$0xff]
    %v442 = vld [vmem:[%s434 + $0x38] sm:$0xff]
    %v443 = vld [vmem:[%s434 + $0x40] sm:$0xff]
    %v444 = vld [vmem:[%s434 + $0x48] sm:$0xff]
    %v445 = vld [vmem:[%s434 + $0x50] sm:$0xff]
    %v446 = vld [vmem:[%s434 + $0x58] sm:$0xff]
    %v447 = vld [vmem:[%s434 + $0x60] sm:$0xff]
    %v448 = vld [vmem:[%s434 + $0x68] sm:$0xff]
    %v449 = vld [vmem:[%s434 + $0x70] sm:$0xff]
    %v450 = vld [vmem:[%s434 + $0x78] sm:$0xff]
    %451 = vmatprep.subr.mxu0 0.0
    %452 = vmatpush1.msra.mxu0 %v450
    %453 = vmatprep.subr.mxu0 0.0
    %454 = vmatpush1.msra.mxu0 %v449
    %455 = vmatprep.subr.mxu0 0.0
    %456 = vmatpush1.msra.mxu0 %v448
    %457 = vmatprep.subr.mxu0 0.0
    %458 = vmatpush1.msra.mxu0 %v447
    %459 = vmatprep.subr.mxu0 0.0
    %460 = vmatpush1.msra.mxu0 %v446
    %461 = vmatprep.subr.mxu0 0.0
    %462 = vmatpush1.msra.mxu0 %v445
    %463 = vmatprep.subr.mxu0 0.0
    %464 = vmatpush1.msra.mxu0 %v444
    %465 = vmatprep.subr.mxu0 0.0
    %466 = vmatpush1.msra.mxu0 %v443
    %467 = vmatprep.subr.mxu0 0.0
    %468 = vmatpush1.msra.mxu0 %v442
    %469 = vmatprep.subr.mxu0 0.0
    %470 = vmatpush1.msra.mxu0 %v441
    %471 = vmatprep.subr.mxu0 0.0
    %472 = vmatpush1.msra.mxu0 %v440
    %473 = vmatprep.subr.mxu0 0.0
    %474 = vmatpush1.msra.mxu0 %v439
    %475 = vmatprep.subr.mxu0 0.0
    %476 = vmatpush1.msra.mxu0 %v438
    %477 = vmatprep.subr.mxu0 0.0
    %478 = vmatpush1.msra.mxu0 %v437
    %479 = vmatprep.subr.mxu0 0.0
    %480 = vmatpush1.msra.mxu0 %v436
    %481 = vmatprep.subr.mxu0 0.0
    %482 = vmatpush1.msra.mxu0 %v435
    %483 = vmatprep.subr.mxu0 0.0
    %484 = vmatpush2.msra.mxu0 0.0
    %485 = vmatprep.subr.mxu0 0.0
    %486 = vmatpush2.msra.mxu0 0.0
    %487 = vmatprep.subr.mxu0 0.0
    %488 = vmatpush2.msra.mxu0 0.0
    %489 = vmatprep.subr.mxu0 0.0
    %490 = vmatpush2.msra.mxu0 0.0
    %491 = vmatprep.subr.mxu0 0.0
    %492 = vmatpush2.msra.mxu0 0.0
    %493 = vmatprep.subr.mxu0 0.0
    %494 = vmatpush2.msra.mxu0 0.0
    %495 = vmatprep.subr.mxu0 0.0
    %496 = vmatpush2.msra.mxu0 0.0
    %497 = vmatprep.subr.mxu0 0.0
    %498 = vmatpush2.msra.mxu0 0.0
    %499 = vmatprep.subr.mxu0 0.0
    %500 = vmatpush2.msra.mxu0 0.0
    %501 = vmatprep.subr.mxu0 0.0
    %502 = vmatpush2.msra.mxu0 0.0
    %503 = vmatprep.subr.mxu0 0.0
    %504 = vmatpush2.msra.mxu0 0.0
    %505 = vmatprep.subr.mxu0 0.0
    %506 = vmatpush2.msra.mxu0 0.0
    %507 = vmatprep.subr.mxu0 0.0
    %508 = vmatpush2.msra.mxu0 0.0
    %509 = vmatprep.subr.mxu0 0.0
    %510 = vmatpush2.msra.mxu0 0.0
    %511 = vmatprep.subr.mxu0 0.0
    %512 = vmatpush2.msra.mxu0 0.0
    %513 = vmatprep.subr.mxu0 0.0
    %514 = vmatpush2.msra.mxu0 0.0
    %515 = vmatprep.mubr.f32.mxu0 0.0
    %516 = vmatmul.mubr.f32.gmra.mxu0 %v426
    %v517 = vpop.f32.mrf.mxu0
    %v518 = vadd.f32 0.0, %v517
    %v519 = vpop.f32.mrf.mxu0
    %520 = vmatprep.mubr.f32.mxu0 0.0
    %521 = vmatmul.mubr.f32.gmra.mxu0 %v427
    %v522 = vpop.f32.mrf.mxu0
    %v523 = vadd.f32 0.0, %v522
    %v524 = vpop.f32.mrf.mxu0
    %525 = vmatprep.mubr.f32.mxu0 0.0
    %526 = vmatmul.mubr.f32.gmra.mxu0 %v428
    %v527 = vpop.f32.mrf.mxu0
    %v528 = vadd.f32 0.0, %v527
    %v529 = vpop.f32.mrf.mxu0
    %530 = vmatprep.mubr.f32.mxu0 0.0
    %531 = vmatmul.mubr.f32.gmra.mxu0 %v429
    %v532 = vpop.f32.mrf.mxu0
    %v533 = vadd.f32 0.0, %v532
    %v534 = vpop.f32.mrf.mxu0
    %535 = vmatprep.mubr.f32.mxu0 0.0
    %536 = vmatmul.mubr.f32.gmra.mxu0 %v430
    %v537 = vpop.f32.mrf.mxu0
    %v538 = vadd.f32 0.0, %v537
    %v539 = vpop.f32.mrf.mxu0
    %540 = vmatprep.mubr.f32.mxu0 0.0
    %541 = vmatmul.mubr.f32.gmra.mxu0 %v431
    %v542 = vpop.f32.mrf.mxu0
    %v543 = vadd.f32 0.0, %v542
    %v544 = vpop.f32.mrf.mxu0
    %545 = vmatprep.mubr.f32.mxu0 0.0
    %546 = vmatmul.mubr.f32.gmra.mxu0 %v432
    %v547 = vpop.f32.mrf.mxu0
    %v548 = vadd.f32 0.0, %v547
    %v549 = vpop.f32.mrf.mxu0
    %550 = vmatprep.mubr.f32.mxu0 0.0
    %551 = vmatmul.mubr.f32.gmra.mxu0 %v433
    %v552 = vpop.f32.mrf.mxu0
    %v553 = vadd.f32 0.0, %v552
    %v554 = vpop.f32.mrf.mxu0
    %555 = vdwg.mxu0
    %s556 = scalar_lea.vmem %s3, 1
    %v557 = vld [vmem:[%s556] sm:$0x1]
    %v559 = vlaneseq
    %v560 = vshrl.u32 %v559, 7
    %v561 = vsub.s32 0, %v560
    %v562 = vrot.slane %v557, %v561
    %564 = vmatprep.subr.mxu0 0.0
    %565 = vmatpush1.msra.mxu0 0.0
    %566 = vmatprep.subr.mxu0 0.0
    %567 = vmatpush1.msra.mxu0 0.0
    %568 = vmatprep.subr.mxu0 0.0
    %569 = vmatpush1.msra.mxu0 0.0
    %570 = vmatprep.subr.mxu0 0.0
    %571 = vmatpush1.msra.mxu0 0.0
    %572 = vmatprep.subr.mxu0 0.0
    %573 = vmatpush1.msra.mxu0 0.0
    %574 = vmatprep.subr.mxu0 0.0
    %575 = vmatpush1.msra.mxu0 0.0
    %576 = vmatprep.subr.mxu0 0.0
    %577 = vmatpush1.msra.mxu0 0.0
    %578 = vmatprep.subr.mxu0 0.0
    %579 = vmatpush1.msra.mxu0 0.0
    %580 = vmatprep.subr.mxu0 0.0
    %581 = vmatpush1.msra.mxu0 %v553
    %582 = vmatprep.subr.mxu0 0.0
    %583 = vmatpush1.msra.mxu0 %v548
    %584 = vmatprep.subr.mxu0 0.0
    %585 = vmatpush1.msra.mxu0 %v543
    %586 = vmatprep.subr.mxu0 0.0
    %587 = vmatpush1.msra.mxu0 %v538
    %588 = vmatprep.subr.mxu0 0.0
    %589 = vmatpush1.msra.mxu0 %v533
    %590 = vmatprep.subr.mxu0 0.0
    %591 = vmatpush1.msra.mxu0 %v528
    %592 = vmatprep.subr.mxu0 0.0
    %593 = vmatpush1.msra.mxu0 %v523
    %594 = vmatprep.subr.mxu0 0.0
    %595 = vmatpush1.msra.mxu0 %v518
    %596 = vmatprep.subr.mxu0 0.0
    %597 = vmatpush2.msra.mxu0 0.0
    %598 = vmatprep.subr.mxu0 0.0
    %599 = vmatpush2.msra.mxu0 0.0
    %600 = vmatprep.subr.mxu0 0.0
    %601 = vmatpush2.msra.mxu0 0.0
    %602 = vmatprep.subr.mxu0 0.0
    %603 = vmatpush2.msra.mxu0 0.0
    %604 = vmatprep.subr.mxu0 0.0
    %605 = vmatpush2.msra.mxu0 0.0
    %606 = vmatprep.subr.mxu0 0.0
    %607 = vmatpush2.msra.mxu0 0.0
    %608 = vmatprep.subr.mxu0 0.0
    %609 = vmatpush2.msra.mxu0 0.0
    %610 = vmatprep.subr.mxu0 0.0
    %611 = vmatpush2.msra.mxu0 0.0
    %612 = vmatprep.subr.mxu0 0.0
    %613 = vmatpush2.msra.mxu0 0.0
    %614 = vmatprep.subr.mxu0 0.0
    %615 = vmatpush2.msra.mxu0 0.0
    %616 = vmatprep.subr.mxu0 0.0
    %617 = vmatpush2.msra.mxu0 0.0
    %618 = vmatprep.subr.mxu0 0.0
    %619 = vmatpush2.msra.mxu0 0.0
    %620 = vmatprep.subr.mxu0 0.0
    %621 = vmatpush2.msra.mxu0 0.0
    %622 = vmatprep.subr.mxu0 0.0
    %623 = vmatpush2.msra.mxu0 0.0
    %624 = vmatprep.subr.mxu0 0.0
    %625 = vmatpush2.msra.mxu0 0.0
    %626 = vmatprep.subr.mxu0 0.0
    %627 = vmatpush2.msra.mxu0 0.0
    %628 = vmatprep.mubr.f32.mxu0 0.0
    %629 = vmatmul.mubr.f32.gmra.mxu0 %v211
    %v630 = vpop.f32.mrf.mxu0
    %v631 = vadd.f32 %v562, %v630
    %v632 = vpop.f32.mrf.mxu0
    %633 = vmatprep.mubr.f32.mxu0 0.0
    %634 = vmatmul.mubr.f32.gmra.mxu0 %v214
    %v635 = vpop.f32.mrf.mxu0
    %v636 = vadd.f32 %v562, %v635
    %v637 = vpop.f32.mrf.mxu0
    %638 = vmatprep.mubr.f32.mxu0 0.0
    %639 = vmatmul.mubr.f32.gmra.mxu0 %v217
    %v640 = vpop.f32.mrf.mxu0
    %v641 = vadd.f32 %v562, %v640
    %v642 = vpop.f32.mrf.mxu0
    %643 = vmatprep.mubr.f32.mxu0 0.0
    %644 = vmatmul.mubr.f32.gmra.mxu0 %v220
    %v645 = vpop.f32.mrf.mxu0
    %v646 = vadd.f32 %v562, %v645
    %v647 = vpop.f32.mrf.mxu0
    %648 = vmatprep.mubr.f32.mxu0 0.0
    %649 = vmatmul.mubr.f32.gmra.mxu0 %v223
    %v650 = vpop.f32.mrf.mxu0
    %v651 = vadd.f32 %v562, %v650
    %v652 = vpop.f32.mrf.mxu0
    %653 = vmatprep.mubr.f32.mxu0 0.0
    %654 = vmatmul.mubr.f32.gmra.mxu0 %v226
    %v655 = vpop.f32.mrf.mxu0
    %v656 = vadd.f32 %v562, %v655
    %v657 = vpop.f32.mrf.mxu0
    %658 = vmatprep.mubr.f32.mxu0 0.0
    %659 = vmatmul.mubr.f32.gmra.mxu0 %v229
    %v660 = vpop.f32.mrf.mxu0
    %v661 = vadd.f32 %v562, %v660
    %v662 = vpop.f32.mrf.mxu0
    %663 = vmatprep.mubr.f32.mxu0 0.0
    %664 = vmatmul.mubr.f32.gmra.mxu0 %v232
    %v665 = vpop.f32.mrf.mxu0
    %v666 = vadd.f32 %v562, %v665
    %v667 = vpop.f32.mrf.mxu0
    %668 = vdwg.mxu0
    %v669 = vadd.f32 %v631, %v636
    %v670 = vadd.f32 %v669, %v641
    %v671 = vadd.f32 %v670, %v646
    %v672 = vadd.f32 %v671, %v651
    %v673 = vadd.f32 %v672, %v656
    %v674 = vadd.f32 %v673, %v661
    %v675 = vadd.f32 %v674, %v666
    %v676 = vrot.slane %v675, 4
    %v677 = vadd.f32 %v675, %v676
    %v678 = vrot.slane %v677, 2
    %v679 = vadd.f32 %v677, %v678
    %v680 = vrot.slane %v679, 1
    %v681 = vadd.f32 %v679, %v680
    %v682 = vmul.f32 %v681, %v352
    %v683 = vmul.f32 %v631, %v631
    %v684 = vmul.f32 %v636, %v636
    %v685 = vmul.f32 %v641, %v641
    %v686 = vmul.f32 %v646, %v646
    %v687 = vmul.f32 %v651, %v651
    %v688 = vmul.f32 %v656, %v656
    %v689 = vmul.f32 %v661, %v661
    %v690 = vmul.f32 %v666, %v666
    %v691 = vadd.f32 %v683, %v684
    %v692 = vadd.f32 %v691, %v685
    %v693 = vadd.f32 %v692, %v686
    %v694 = vadd.f32 %v693, %v687
    %v695 = vadd.f32 %v694, %v688
    %v696 = vadd.f32 %v695, %v689
    %v697 = vadd.f32 %v696, %v690
    %v698 = vrot.slane %v697, 4
    %v699 = vadd.f32 %v697, %v698
    %v700 = vrot.slane %v699, 2
    %v701 = vadd.f32 %v699, %v700
    %v702 = vrot.slane %v701, 1
    %v703 = vadd.f32 %v701, %v702
    %v704 = vmul.f32 %v703, %v352
    %v705 = vmul.f32 %v682, %v682
    %v706 = vsub.f32 %v704, %v705
    %v707 = vsub.f32 %v631, %v682
    %v708 = vsub.f32 %v636, %v682
    %v709 = vsub.f32 %v641, %v682
    %v710 = vsub.f32 %v646, %v682
    %v711 = vsub.f32 %v651, %v682
    %v712 = vsub.f32 %v656, %v682
    %v713 = vsub.f32 %v661, %v682
    %v714 = vsub.f32 %v666, %v682
    %v715 = vadd.f32 %v706, 1e-05
    %v716 = vrsqrt.pop %v715
    %v717 = vmul.f32 %v707, %v716
    %v718 = vmul.f32 %v708, %v716
    %v719 = vmul.f32 %v709, %v716
    %v720 = vmul.f32 %v710, %v716
    %v721 = vmul.f32 %v711, %v716
    %v722 = vmul.f32 %v712, %v716
    %v723 = vmul.f32 %v713, %v716
    %v724 = vmul.f32 %v714, %v716
    %s725 = scalar_lea.vmem %s4, 1
    %v726 = vld [vmem:[%s725] sm:$0x1]
    %v728 = vlaneseq
    %v729 = vshrl.u32 %v728, 7
    %v730 = vsub.s32 0, %v729
    %v731 = vrot.slane %v726, %v730
    %v733 = vmul.f32 %v717, %v731
    %v734 = vmul.f32 %v718, %v731
    %v735 = vmul.f32 %v719, %v731
    %v736 = vmul.f32 %v720, %v731
    %v737 = vmul.f32 %v721, %v731
    %v738 = vmul.f32 %v722, %v731
    %v739 = vmul.f32 %v723, %v731
    %v740 = vmul.f32 %v724, %v731
    %s741 = scalar_lea.vmem %s5, 1
    %v742 = vld [vmem:[%s741] sm:$0x1]
    %v744 = vlaneseq
    %v745 = vshrl.u32 %v744, 7
    %v746 = vsub.s32 0, %v745
    %v747 = vrot.slane %v742, %v746
    %v749 = vadd.f32 %v733, %v747
    %v750 = vadd.f32 %v734, %v747
    %v751 = vadd.f32 %v735, %v747
    %v752 = vadd.f32 %v736, %v747
    %v753 = vadd.f32 %v737, %v747
    %v754 = vadd.f32 %v738, %v747
    %v755 = vadd.f32 %v739, %v747
    %v756 = vadd.f32 %v740, %v747
    %757 = vst [vmem:[#allocation8] sm:$0xff] %v749
    %758 = vst [vmem:[#allocation8 + $0x8] sm:$0xff] %v750
    %759 = vst [vmem:[#allocation8 + $0x10] sm:$0xff] %v751
    %760 = vst [vmem:[#allocation8 + $0x18] sm:$0xff] %v752
    %761 = vst [vmem:[#allocation8 + $0x20] sm:$0xff] %v753
    %762 = vst [vmem:[#allocation8 + $0x28] sm:$0xff] %v754
    %763 = vst [vmem:[#allocation8 + $0x30] sm:$0xff] %v755
    %764 = vst [vmem:[#allocation8 + $0x38] sm:$0xff] %v756
    // Predicated region
    $region38: #{tpu_custom_call.1} parent=1 // pred_check
      _
    $region39: #{tpu_custom_call.1} parent=1 // pred_check_branch
      %766 = sbr.rel (0) target = $region41
    $region40: #{tpu_custom_call.1} parent=1 // pred_region
      %s768 = ssub.s32 1024, 1024
      %769 = vsyncadd [#allocation4], %s768
      %s770 = sshll.u32 [#allocation8], 4
      %s771 = int_to_ptr.vmem [resolvable:$true] %s770
      %776 = dma.vmem_to_hbm [thread:$0]  %s771, 1024, %s6, [#allocation4], 128, 128, 8
    $region41: #{tpu_custom_call.1} parent=1 // pred_fallthru
      _
    // Predicated region
    $region42: #{tpu_custom_call.1} parent=1 // pred_check
      _
    $region43: #{tpu_custom_call.1} parent=1 // pred_check_branch
      %778 = sbr.rel (0) target = $region45
    $region44: #{tpu_custom_call.1} parent=1 // pred_region
      %779 = dma.done [#allocation4], 1024
    $region45: #{tpu_custom_call.1} parent=1 // pred_fallthru
      _
    %780 = vsyncpa [#allocation3], 1
    %781 = vsyncpa [#allocation6], 1
    %782 = vsyncpa [#allocation4], 1

</llo_original>
